<compile_context>
chip_gen: v5e
topology: v5e:2x2
jax: 0.10.0
libtpu: 0.0.40
codegen_flags: <defaults>
</compile_context>

<pallas_src>
import functools

import jax
import jax.numpy as jnp
from jax import lax
from jax.experimental import pallas as pl
from jax.experimental.pallas import tpu as pltpu


def _round_up(x, m):
    return (x + m - 1) // m * m


@functools.lru_cache(maxsize=1)
def _vmem_budget_bytes():
    """Per-generation VMEM budget, leaving headroom for compiler scratch/semaphores."""
    cap = 128 * 2**20
    try:
        cap = int(pltpu.get_tpu_info().vmem_capacity_bytes)
    except Exception:
        pass  # fall back to 128 MiB parts; the 3/4 factor keeps v7x (64 MiB) safe too
    return int(cap * 3 // 4)   # ~96 MiB on v5e/v6e, ~48 MiB on v7x


def _gelu_exact(h):
    # Exact erf-based GELU — matches torch.nn.GELU() default numerics.
    # TODO(synk): switch to the tanh approximation (EUP path) if exact torch parity can be relaxed.
    return 0.5 * h * (1.0 + lax.erf(h * jnp.float32(0.7071067811865476)))


# --------------- fast path: both weight matrices resident in VMEM -----------------
def _ffn_kernel_resident(x_ref, w1_ref, b1_ref, w2_ref, b2_ref, o_ref):
    x = x_ref[...]                                                     # (tm, dim_p)
    h = jnp.dot(x, w1_ref[...], preferred_element_type=jnp.float32) + b1_ref[...]
    h = _gelu_exact(h)
    y = jnp.dot(h.astype(x.dtype), w2_ref[...], preferred_element_type=jnp.float32)
    o_ref[...] = (y + b2_ref[...]).astype(o_ref.dtype)


# --------------- tiled path: hidden axis is the (last) reduction grid axis --------
def _ffn_kernel_tiled(x_ref, w1_ref, b1_ref, w2_ref, b2_ref, o_ref, acc_ref):
    k = pl.program_id(1)

    @pl.when(k == 0)
    def _():
        acc_ref[...] = jnp.zeros_like(acc_ref)

    x = x_ref[...]                                                     # (tm, dim_p)
    # ---- Linear 1, hidden chunk k:  x @ W1[:, k] + b1[k]   (MXU, f32 accum) ----
    h = jnp.dot(x, w1_ref[...], preferred_element_type=jnp.float32) + b1_ref[...]
    h = _gelu_exact(h)
    # ---- Linear 2 partial product, accumulated over hidden chunks ----
    acc_ref[...] += jnp.dot(h.astype(x.dtype), w2_ref[...],
                            preferred_element_type=jnp.float32)

    @pl.when(k == pl.num_programs(1) - 1)
    def _():
        o_ref[...] = (acc_ref[...] + b2_ref[...]).astype(o_ref.dtype)


@functools.partial(jax.jit, static_argnames=("tm", "tk", "use_bf16"))
def feed_forward(x, w1, b1, w2, b2, *, tm=None, tk=None, use_bf16=False):
    """x: (..., dim); w1: (dim, hidden); w2: (hidden, dim). Returns x.shape/x.dtype."""
    orig_shape = x.shape
    orig_dtype = x.dtype
    dim = orig_shape[-1]
    hidden = w1.shape[1]

    x2 = x.reshape(-1, dim)
    M = x2.shape[0]

    # Optional bf16 MXU path (numerics change slightly; accumulation stays f32).
    if use_bf16 and x2.dtype == jnp.float32:
        x2 = x2.astype(jnp.bfloat16)
        w1 = w1.astype(jnp.bfloat16)
        w2 = w2.astype(jnp.bfloat16)

    isz = x2.dtype.itemsize
    tm_floor = max(8, 32 // isz)           # dense sublane tiles: 8 f32 / 16 bf16 / 32 int8
    budget = _vmem_budget_bytes()

    dim_p = _round_up(dim, 128)
    hidden_full = _round_up(hidden, 128)

    # ---- row tile: large enough to amortize weight streaming (AI ~ tm flop/byte in
    # bf16), shrunk for small M so there are >= 2 row tiles, with an even-tile-count
    # bias so the "parallel" axis splits evenly across v7x's two TensorCores.
    if tm is None:
        tm = 512
        while tm > tm_floor and _round_up(M, tm_floor) <= tm:
            tm //= 2
        num_i = pl.cdiv(M, tm)
        if num_i > 1 and num_i % 2 == 1 and tm > 256:
            tm //= 2

    # ---- VMEM footprint estimates (double-buffered BlockSpec tiles + scratch) ----
    def _resident_est(tm_):
        return (2 * dim_p * hidden_full * isz          # W1 (resident, conservative 2x)
                + 2 * hidden_full * dim_p * isz        # W2
                + 2 * (hidden_full + dim_p) * isz      # biases
                + 4 * tm_ * dim_p * isz                # x + out tiles, double-buffered
                + 2 * tm_ * hidden_full * 4)           # intermediate h (f32) headroom

    def _tiled_est(tm_, tk_):
        return (4 * tm_ * dim_p * isz                  # x + out tiles, double-buffered
                + 2 * dim_p * tk_ * isz                # W1 hidden chunk
                + 2 * tk_ * dim_p * isz                # W2 hidden chunk
                + 2 * (tk_ + dim_p) * isz              # bias chunks
                + tm_ * dim_p * 4                      # f32 accumulator scratch
                + 2 * tm_ * tk_ * 4)                   # intermediate h headroom

    use_resident = (tk is None) and (_resident_est(tm) <= budget)

    if use_resident:
        hidden_p = hidden_full
        est = _resident_est(tm)
    else:
        if tk is None:
            # Pick the largest 128-multiple chunk <= 512 that divides the aligned
            # hidden size (avoids re-padding already-aligned weights); shrink tk
            # before tm when the footprint exceeds the per-generation budget.
            cands = [t for t in (512, 384, 256, 128) if hidden_full % t == 0]
            tk = cands[0]
            for t in cands:
                if _tiled_est(tm, t) <= budget:
                    tk = t
                    break
        while _tiled_est(tm, tk) > budget and tm > tm_floor:
            tm //= 2
        hidden_p = _round_up(hidden, tk)
        est = _tiled_est(tm, tk)

    Mp = _round_up(M, tm)
    vmem_limit = int(min(budget, max(32 * 2**20, 2 * est)))

    # ---- pad only when needed (zero padding is exact: GELU(0)=0, zero cols/rows) ----
    def pad2(a, r, c):
        return a if a.shape == (r, c) else jnp.pad(a, ((0, r - a.shape[0]),
                                                       (0, c - a.shape[1])))

    def pad_row(v, c):
        v2 = v.reshape(1, -1)
        return v2 if v2.shape[1] == c else jnp.pad(v2, ((0, 0), (0, c - v2.shape[1])))

    x_p = pad2(x2, Mp, dim_p)
    w1_p = pad2(w1, dim_p, hidden_p)
    b1_p = pad_row(b1, hidden_p)
    w2_p = pad2(w2, hidden_p, dim_p)
    b2_p = pad_row(b2, dim_p)

    if use_resident:
        out = pl.pallas_call(
            _ffn_kernel_resident,
            out_shape=jax.ShapeDtypeStruct((Mp, dim_p), orig_dtype),
            grid_spec=pltpu.PrefetchScalarGridSpec(
                num_scalar_prefetch=0,
                grid=(Mp // tm,),
                in_specs=[
                    pl.BlockSpec((tm, dim_p), lambda i: (i, 0)),          # x rows
                    pl.BlockSpec((dim_p, hidden_p), lambda i: (0, 0)),    # W1 (resident)
                    pl.BlockSpec((1, hidden_p), lambda i: (0, 0)),        # b1
                    pl.BlockSpec((hidden_p, dim_p), lambda i: (0, 0)),    # W2 (resident)
                    pl.BlockSpec((1, dim_p), lambda i: (0, 0)),           # b2
                ],
                out_specs=pl.BlockSpec((tm, dim_p), lambda i: (i, 0)),
            ),
            compiler_params=pltpu.CompilerParams(
                dimension_semantics=("parallel",),
                vmem_limit_bytes=vmem_limit,
            ),
        )(x_p, w1_p, b1_p, w2_p, b2_p)
    else:
        out = pl.pallas_call(
            _ffn_kernel_tiled,
            out_shape=jax.ShapeDtypeStruct((Mp, dim_p), orig_dtype),
            grid_spec=pltpu.PrefetchScalarGridSpec(
                num_scalar_prefetch=0,
                grid=(Mp // tm, hidden_p // tk),
                in_specs=[
                    pl.BlockSpec((tm, dim_p), lambda i, k: (i, 0)),    # x rows (reused over k)
                    pl.BlockSpec((dim_p, tk), lambda i, k: (0, k)),    # W1 hidden chunk
                    pl.BlockSpec((1, tk), lambda i, k: (0, k)),        # b1 hidden chunk
                    pl.BlockSpec((tk, dim_p), lambda i, k: (k, 0)),    # W2 hidden chunk
                    pl.BlockSpec((1, dim_p), lambda i, k: (0, 0)),     # b2 (invariant)
                ],
                out_specs=pl.BlockSpec((tm, dim_p), lambda i, k: (i, 0)),
                scratch_shapes=[pltpu.VMEM((tm, dim_p), jnp.float32)],
            ),
            compiler_params=pltpu.CompilerParams(
                dimension_semantics=("parallel", "arbitrary"),
                vmem_limit_bytes=vmem_limit,
            ),
        )(x_p, w1_p, b1_p, w2_p, b2_p)

    return out[:M, :dim].reshape(orig_shape)


def _reference(x, w1, b1, w2, b2):
    h = jnp.dot(x, w1) + b1
    h = jax.nn.gelu(h, approximate=False)
    return jnp.dot(h, w2) + b2


if __name__ == "__main__":
    # Small shapes consistent with the module: tokens of dim=32, hidden=64.
    batch, seq, dim, hidden = 2, 8, 32, 64

    key = jax.random.PRNGKey(0)
    kx, k1, k2, k3, k4 = jax.random.split(key, 5)

    x = jax.random.normal(kx, (batch, seq, dim), dtype=jnp.float32)
    # Deterministic synthetic params (shapes from nn.Linear(dim, hidden), nn.Linear(hidden, dim)).
    w1 = jax.random.normal(k1, (dim, hidden), dtype=jnp.float32) * 0.05
    b1 = jax.random.normal(k2, (hidden,), dtype=jnp.float32) * 0.05
    w2 = jax.random.normal(k3, (hidden, dim), dtype=jnp.float32) * 0.05
    b2 = jax.random.normal(k4, (dim,), dtype=jnp.float32) * 0.05

    out = feed_forward(x, w1, b1, w2, b2)
    jax.block_until_ready(out)

    ref = _reference(x, w1, b1, w2, b2)
    assert out.shape == x.shape and out.dtype == x.dtype
    assert jnp.allclose(out, ref, atol=1e-5, rtol=1e-4), "mismatch vs reference"

    print("KERNEL_OK")
</pallas_src>

<mosaic_0001>
module attributes {stable_mosaic.version = 11 : i64} {
  func.func @_ffn_kernel_resident(%arg0: i32, %arg1: memref<8x128xf32, #tpu.memory_space<vmem>>, %arg2: memref<128x128xf32, #tpu.memory_space<vmem>>, %arg3: memref<1x128xf32, #tpu.memory_space<vmem>>, %arg4: memref<128x128xf32, #tpu.memory_space<vmem>>, %arg5: memref<1x128xf32, #tpu.memory_space<vmem>>, %arg6: memref<8x128xf32, #tpu.memory_space<vmem>>) attributes {dimension_semantics = [#tpu.dimension_semantics<parallel>], iteration_bounds = array<i64: 2>, scalar_prefetch = 0 : i64, scratch_operands = 0 : i64, tpu.core_type = #tpu.core_type<tc>, window_params = [{transform_indices = @transform_0, window_bounds = array<i64: 8, 128>}, {pipeline_mode = #tpu.pipeline_mode<synchronous>, transform_indices = @transform_1, window_bounds = array<i64: 128, 128>}, {pipeline_mode = #tpu.pipeline_mode<synchronous>, transform_indices = @transform_2, window_bounds = array<i64: 1, 128>}, {pipeline_mode = #tpu.pipeline_mode<synchronous>, transform_indices = @transform_3, window_bounds = array<i64: 128, 128>}, {pipeline_mode = #tpu.pipeline_mode<synchronous>, transform_indices = @transform_4, window_bounds = array<i64: 1, 128>}, {transform_indices = @transform_5, window_bounds = array<i64: 8, 128>}]} {
    %c0 = arith.constant 0 : index
    %c0_0 = arith.constant 0 : index
    %0 = vector.load %arg1[%c0, %c0_0] : memref<8x128xf32, #tpu.memory_space<vmem>>, vector<8x128xf32>
    %c0_1 = arith.constant 0 : index
    %c0_2 = arith.constant 0 : index
    %1 = vector.load %arg2[%c0_1, %c0_2] : memref<128x128xf32, #tpu.memory_space<vmem>>, vector<128x128xf32>
    %cst = arith.constant dense<0.000000e+00> : vector<8x128xf32>
    %2 = tpu.matmul %0, %1, %cst {dimension_numbers = #tpu.dot_dimension_numbers<[1], [0], [0], [1], [0, 0, 1, 1], [], []>} : vector<8x128xf32>, vector<128x128xf32>, vector<8x128xf32> -> vector<8x128xf32>
    %c0_3 = arith.constant 0 : index
    %c0_4 = arith.constant 0 : index
    %3 = vector.load %arg3[%c0_3, %c0_4] : memref<1x128xf32, #tpu.memory_space<vmem>>, vector<1x128xf32>
    %4 = vector.broadcast %3 : vector<1x128xf32> to vector<8x128xf32>
    %5 = arith.addf %2, %4 : vector<8x128xf32>
    %cst_5 = arith.constant 5.000000e-01 : f32
    %6 = vector.broadcast %cst_5 : f32 to vector<8x128xf32>
    %7 = arith.mulf %6, %5 : vector<8x128xf32>
    %cst_6 = arith.constant 0.707106769 : f32
    %8 = vector.broadcast %cst_6 : f32 to vector<8x128xf32>
    %9 = arith.mulf %5, %8 : vector<8x128xf32>
    %10 = math.erf %9 : vector<8x128xf32>
    %cst_7 = arith.constant 1.000000e+00 : f32
    %11 = vector.broadcast %cst_7 : f32 to vector<8x128xf32>
    %12 = arith.addf %11, %10 : vector<8x128xf32>
    %13 = arith.mulf %7, %12 : vector<8x128xf32>
    %c0_8 = arith.constant 0 : index
    %c0_9 = arith.constant 0 : index
    %14 = vector.load %arg4[%c0_8, %c0_9] : memref<128x128xf32, #tpu.memory_space<vmem>>, vector<128x128xf32>
    %cst_10 = arith.constant dense<0.000000e+00> : vector<8x128xf32>
    %15 = tpu.matmul %13, %14, %cst_10 {dimension_numbers = #tpu.dot_dimension_numbers<[1], [0], [0], [1], [0, 0, 1, 1], [], []>} : vector<8x128xf32>, vector<128x128xf32>, vector<8x128xf32> -> vector<8x128xf32>
    %c0_11 = arith.constant 0 : index
    %c0_12 = arith.constant 0 : index
    %16 = vector.load %arg5[%c0_11, %c0_12] : memref<1x128xf32, #tpu.memory_space<vmem>>, vector<1x128xf32>
    %17 = vector.broadcast %16 : vector<1x128xf32> to vector<8x128xf32>
    %18 = arith.addf %15, %17 : vector<8x128xf32>
    %c0_13 = arith.constant 0 : index
    %c0_14 = arith.constant 0 : index
    %19 = vector.load %arg6[%c0_13, %c0_14] : memref<8x128xf32, #tpu.memory_space<vmem>>, vector<8x128xf32>
    tpu.vector_store %arg6[%c0_13, %c0_14], %18 {strides = array<i32>} : memref<8x128xf32, #tpu.memory_space<vmem>>, vector<8x128xf32>,
    return
  }
  func.func @transform_0(%arg0: i32) -> (i32, i32) {
    %c0_i32 = arith.constant 0 : i32
    %c0_i32_0 = arith.constant 0 : i32
    return %arg0, %c0_i32 : i32, i32
  }
  func.func @transform_1(%arg0: i32) -> (i32, i32) {
    %c0_i32 = arith.constant 0 : i32
    %c0_i32_0 = arith.constant 0 : i32
    %c0_i32_1 = arith.constant 0 : i32
    return %c0_i32, %c0_i32_0 : i32, i32
  }
  func.func @transform_2(%arg0: i32) -> (i32, i32) {
    %c0_i32 = arith.constant 0 : i32
    %c0_i32_0 = arith.constant 0 : i32
    %c0_i32_1 = arith.constant 0 : i32
    return %c0_i32, %c0_i32_0 : i32, i32
  }
  func.func @transform_3(%arg0: i32) -> (i32, i32) {
    %c0_i32 = arith.constant 0 : i32
    %c0_i32_0 = arith.constant 0 : i32
    %c0_i32_1 = arith.constant 0 : i32
    return %c0_i32, %c0_i32_0 : i32, i32
  }
  func.func @transform_4(%arg0: i32) -> (i32, i32) {
    %c0_i32 = arith.constant 0 : i32
    %c0_i32_0 = arith.constant 0 : i32
    %c0_i32_1 = arith.constant 0 : i32
    return %c0_i32, %c0_i32_0 : i32, i32
  }
  func.func @transform_5(%arg0: i32) -> (i32, i32) {
    %c0_i32 = arith.constant 0 : i32
    %c0_i32_0 = arith.constant 0 : i32
    return %arg0, %c0_i32 : i32, i32
  }
}

</mosaic_0001>

<llo_original>
// kernel: feed_forward.1
$region0: #{feed_forward.1}
  #allocation0 [shape = 'u32[]', space=smem, size = 0x4, offset = 0x4, fixed_abs, tag = 'smem constant byte address 0x4 - core index']
  #allocation1 [shape = 'u32[72,128]{1,0:T(1,128)}', space=vmem, size = 0x9000, scoped, tag = 'internal scratch']
  %s0 = inlined_call_operand.vmem [shape: f32[16,128], index: 0, kind: input, shape index: {}]
  %s1 = inlined_call_operand.vmem [shape: f32[128,128], index: 1, kind: input, shape index: {}]
  %s2 = inlined_call_operand.vmem [shape: f32[1,128], index: 2, kind: input, shape index: {}]
  %s3 = inlined_call_operand.vmem [shape: f32[128,128], index: 3, kind: input, shape index: {}]
  %s4 = inlined_call_operand.vmem [shape: f32[1,128], index: 4, kind: input, shape index: {}]
  %s5 = inlined_call_operand.vmem [shape: f32[16,128], index: 5, kind: output, shape index: {}]
  %s6 = sld [smem:[#allocation0]]
  $region53: #{feed_forward.1} parent=0
    _
  %s8 = ssub.s32 1, %s6
  %s9 = scalar_select 0, %s8, %s6
  loop: start=0, step=1, limit=4
  $region2: #{feed_forward.1} parent=0 // loop_pre_header
    _
  $region3: #{feed_forward.1} parent=0 // loop_header
    %s11 = sphi 0, %s15
    %p12 = scmp.ge.s32.totalorder %s11, 4
    %s21 = sphi 0, %s23
    %s24 = sphi 0, %s21
    %s25 = sphi 0, %s24
    %s41 = sphi 0, %s25
    %s45 = sphi 0, %s45
    %s47 = sphi 0, %s45
    %s48 = sphi 0, %s47
    %s62 = sphi 0, %s48
    %s66 = sphi 0, %s66
    %s68 = sphi 0, %s66
    %s69 = sphi 0, %s68
    %s83 = sphi 0, %s69
    %s87 = sphi 0, %s87
    %s89 = sphi 0, %s87
    %s90 = sphi 0, %s89
    %s104 = sphi 0, %s90
    %s108 = sphi 0, %s108
    %s110 = sphi 0, %s108
    %s111 = sphi 0, %s110
    %s125 = sphi 0, %s111
    %s131 = sphi 0, %s133
    %s134 = sphi 0, %s131
    %s135 = sphi 0, %s134
    %s151 = sphi 0, %s135
  $region4: #{feed_forward.1} parent=0 // loop_header_branch
    %14 = sbr.rel (%p12) target = $region8
  $region5: #{feed_forward.1} parent=0 // loop_body
    %s16 = ssub.s32 %s11, 1
    %s17 = ssub.s32 %s11, 2
    %s18 = sadd.s32 %s11, 1
    %s19 = ssub.s32 %s11, %s18
    %p20 = scmp.eq.s32.totalorder %s19, 0
    %s22 = sadd.s32 %s21, 1
    %s23 = scalar_select %p20, %s21, %s22
    %p26 = pneg %p20
    %p27 = scmp.eq.s32.totalorder %s11, 1
    %p28 = por %p26, %p27
    %p29 = scmp.ne.s32.totalorder %s21, %s24
    %p30 = scmp.eq.s32.totalorder %s11, 0
    %p31 = por %p29, %p30
    %p32 = scmp.ne.s32.totalorder %s21, %s24
    %p33 = scmp.eq.s32.totalorder %s16, 1
    %p34 = por %p32, %p33
    %p35 = scmp.ne.s32.totalorder %s24, %s25
    %p36 = scmp.eq.s32.totalorder %s16, 0
    %p37 = por %p35, %p36
    %p38 = scmp.ne.s32.totalorder %s24, %s25
    %p39 = scmp.eq.s32.totalorder %s17, 1
    %p40 = por %p38, %p39
    %p42 = scmp.ne.s32.totalorder %s25, %s41
    %p43 = scmp.eq.s32.totalorder %s17, 0
    %p44 = por %p42, %p43
    %s46 = sadd.s32 %s45, 1
    %p49 = scmp.eq.s32.totalorder %s11, 1
    %p50 = scmp.ne.s32.totalorder %s45, %s47
    %p51 = scmp.eq.s32.totalorder %s11, 0
    %p52 = por %p50, %p51
    %p53 = scmp.ne.s32.totalorder %s45, %s47
    %p54 = scmp.eq.s32.totalorder %s16, 1
    %p55 = por %p53, %p54
    %p56 = scmp.ne.s32.totalorder %s47, %s48
    %p57 = scmp.eq.s32.totalorder %s16, 0
    %p58 = por %p56, %p57
    %p59 = scmp.ne.s32.totalorder %s47, %s48
    %p60 = scmp.eq.s32.totalorder %s17, 1
    %p61 = por %p59, %p60
    %p63 = scmp.ne.s32.totalorder %s48, %s62
    %p64 = scmp.eq.s32.totalorder %s17, 0
    %p65 = por %p63, %p64
    %s67 = sadd.s32 %s66, 1
    %p70 = scmp.eq.s32.totalorder %s11, 1
    %p71 = scmp.ne.s32.totalorder %s66, %s68
    %p72 = scmp.eq.s32.totalorder %s11, 0
    %p73 = por %p71, %p72
    %p74 = scmp.ne.s32.totalorder %s66, %s68
    %p75 = scmp.eq.s32.totalorder %s16, 1
    %p76 = por %p74, %p75
    %p77 = scmp.ne.s32.totalorder %s68, %s69
    %p78 = scmp.eq.s32.totalorder %s16, 0
    %p79 = por %p77, %p78
    %p80 = scmp.ne.s32.totalorder %s68, %s69
    %p81 = scmp.eq.s32.totalorder %s17, 1
    %p82 = por %p80, %p81
    %p84 = scmp.ne.s32.totalorder %s69, %s83
    %p85 = scmp.eq.s32.totalorder %s17, 0
    %p86 = por %p84, %p85
    %s88 = sadd.s32 %s87, 1
    %p91 = scmp.eq.s32.totalorder %s11, 1
    %p92 = scmp.ne.s32.totalorder %s87, %s89
    %p93 = scmp.eq.s32.totalorder %s11, 0
    %p94 = por %p92, %p93
    %p95 = scmp.ne.s32.totalorder %s87, %s89
    %p96 = scmp.eq.s32.totalorder %s16, 1
    %p97 = por %p95, %p96
    %p98 = scmp.ne.s32.totalorder %s89, %s90
    %p99 = scmp.eq.s32.totalorder %s16, 0
    %p100 = por %p98, %p99
    %p101 = scmp.ne.s32.totalorder %s89, %s90
    %p102 = scmp.eq.s32.totalorder %s17, 1
    %p103 = por %p101, %p102
    %p105 = scmp.ne.s32.totalorder %s90, %s104
    %p106 = scmp.eq.s32.totalorder %s17, 0
    %p107 = por %p105, %p106
    %s109 = sadd.s32 %s108, 1
    %p112 = scmp.eq.s32.totalorder %s11, 1
    %p113 = scmp.ne.s32.totalorder %s108, %s110
    %p114 = scmp.eq.s32.totalorder %s11, 0
    %p115 = por %p113, %p114
    %p116 = scmp.ne.s32.totalorder %s108, %s110
    %p117 = scmp.eq.s32.totalorder %s16, 1
    %p118 = por %p116, %p117
    %p119 = scmp.ne.s32.totalorder %s110, %s111
    %p120 = scmp.eq.s32.totalorder %s16, 0
    %p121 = por %p119, %p120
    %p122 = scmp.ne.s32.totalorder %s110, %s111
    %p123 = scmp.eq.s32.totalorder %s17, 1
    %p124 = por %p122, %p123
    %p126 = scmp.ne.s32.totalorder %s111, %s125
    %p127 = scmp.eq.s32.totalorder %s17, 0
    %p128 = por %p126, %p127
    %s129 = ssub.s32 %s11, %s18
    %p130 = scmp.eq.s32.totalorder %s129, 0
    %s132 = sadd.s32 %s131, 1
    %s133 = scalar_select %p130, %s131, %s132
    %p136 = pneg %p130
    %p137 = scmp.eq.s32.totalorder %s11, 1
    %p138 = por %p136, %p137
    %p139 = scmp.ne.s32.totalorder %s131, %s134
    %p140 = scmp.eq.s32.totalorder %s11, 0
    %p141 = por %p139, %p140
    %p142 = scmp.ne.s32.totalorder %s131, %s134
    %p143 = scmp.eq.s32.totalorder %s16, 1
    %p144 = por %p142, %p143
    %p145 = scmp.ne.s32.totalorder %s134, %s135
    %p146 = scmp.eq.s32.totalorder %s16, 0
    %p147 = por %p145, %p146
    %p148 = scmp.ne.s32.totalorder %s134, %s135
    %p149 = scmp.eq.s32.totalorder %s17, 1
    %p150 = por %p148, %p149
    %p152 = scmp.ne.s32.totalorder %s135, %s151
    %p153 = scmp.eq.s32.totalorder %s17, 0
    %p154 = por %p152, %p153
    %p155 = scmp.le.s32.totalorder 1, %s11
    %p156 = scmp.lt.s32.totalorder %s11, 3
    %p157 = pnand %p155, %p156
    %p158 = pneg %p157
    // Predicated region
    $region9: #{feed_forward.1} parent=5 // pred_check
      _
    $region10: #{feed_forward.1} parent=5 // pred_check_branch
      %160 = sbr.rel (%p157) target = $region12
    $region11: #{feed_forward.1} parent=5 // pred_region
      %s161 = ssub.s32 %s11, 1
      // Predicated region
      $region13: #{feed_forward.1} parent=11 // pred_check
        %p162 = pneg %p58
      $region14: #{feed_forward.1} parent=11 // pred_check_branch
        %164 = sbr.rel (%p162) target = $region16
      $region15: #{feed_forward.1} parent=11 // pred_region
        _
      $region16: #{feed_forward.1} parent=11 // pred_fallthru
        _
      // Predicated region
      $region17: #{feed_forward.1} parent=11 // pred_check
        %p165 = pneg %p79
      $region18: #{feed_forward.1} parent=11 // pred_check_branch
        %167 = sbr.rel (%p165) target = $region20
      $region19: #{feed_forward.1} parent=11 // pred_region
        _
      $region20: #{feed_forward.1} parent=11 // pred_fallthru
        _
      // Predicated region
      $region21: #{feed_forward.1} parent=11 // pred_check
        %p168 = pneg %p100
      $region22: #{feed_forward.1} parent=11 // pred_check_branch
        %170 = sbr.rel (%p168) target = $region24
      $region23: #{feed_forward.1} parent=11 // pred_region
        _
      $region24: #{feed_forward.1} parent=11 // pred_fallthru
        _
      // Predicated region
      $region25: #{feed_forward.1} parent=11 // pred_check
        %p171 = pneg %p121
      $region26: #{feed_forward.1} parent=11 // pred_check_branch
        %173 = sbr.rel (%p171) target = $region28
      $region27: #{feed_forward.1} parent=11 // pred_region
        _
      $region28: #{feed_forward.1} parent=11 // pred_fallthru
        _
    $region12: #{feed_forward.1} parent=5 // pred_fallthru
      _
    %p174 = scmp.lt.s32.totalorder %s11, 2
    // Predicated region
    $region29: #{feed_forward.1} parent=5 // pred_check
      %p175 = pneg %p174
    $region30: #{feed_forward.1} parent=5 // pred_check_branch
      %177 = sbr.rel (%p175) target = $region32
    $region31: #{feed_forward.1} parent=5 // pred_region
      // Predicated region
      $region33: #{feed_forward.1} parent=31 // pred_check
        %p178 = pneg %p31
      $region34: #{feed_forward.1} parent=31 // pred_check_branch
        %180 = sbr.rel (%p178) target = $region36
      $region35: #{feed_forward.1} parent=31 // pred_region
        %p181 = scmp.lt.s32.totalorder %s11, 1
        %s182 = scalar_select %p181, %s11, 1
        %s183 = smul.addr %s182, 8
        %s184 = scalar_lea.vmem %s0, %s183
      $region36: #{feed_forward.1} parent=31 // pred_fallthru
        _
    $region32: #{feed_forward.1} parent=5 // pred_fallthru
      _
    %p185 = scmp.le.s32.totalorder 1, %s11
    %p186 = scmp.lt.s32.totalorder %s11, 3
    %p187 = pnand %p185, %p186
    %p188 = pneg %p187
    // Predicated region
    $region37: #{feed_forward.1} parent=5 // pred_check
      _
    $region38: #{feed_forward.1} parent=5 // pred_check_branch
      %190 = sbr.rel (%p187) target = $region40
    $region39: #{feed_forward.1} parent=5 // pred_region
      %s191 = ssub.s32 %s11, 1
      %p192 = scmp.lt.s32.totalorder %s16, 1
      %s193 = scalar_select %p192, %s16, 1
      %s194 = smul.addr %s193, 8
      %s195 = scalar_lea.vmem %s0, %s194
      %p196 = pneg %p37
      %p197 = pneg %p34
      %p198 = pneg %p58
      %p199 = pneg %p55
      %p200 = pneg %p79
      %p201 = pneg %p76
      %p202 = pneg %p100
      %p203 = pneg %p97
      %p204 = pneg %p121
      %p205 = pneg %p118
      %p206 = pneg %p147
      %p207 = pneg %p144
      %p208 = scmp.lt.s32.totalorder %s16, 1
      %s209 = scalar_select %p208, %s16, 1
      %s210 = smul.addr %s209, 8
      %s211 = scalar_lea.vmem %s5, %s210
      %p212 = scmp.lt.s32.totalorder %s16, 1
      %s213 = scalar_select %p212, %s16, 1
      %s214 = smul.addr %s213, 8
      %s215 = scalar_lea.vmem %s0, %s214
      %p216 = scmp.lt.s32.totalorder %s16, 1
      %s217 = scalar_select %p216, %s16, 1
      %s218 = smul.addr %s217, 8
      %s219 = scalar_lea.vmem %s5, %s218
      %v220 = vld [vmem:[%s215] sm:$0xff]
      %v221 = vld [vmem:[%s1] sm:$0xff]
      %v222 = vld [vmem:[%s1 + $0x8] sm:$0xff]
      %v223 = vld [vmem:[%s1 + $0x10] sm:$0xff]
      %v224 = vld [vmem:[%s1 + $0x18] sm:$0xff]
      %v225 = vld [vmem:[%s1 + $0x20] sm:$0xff]
      %v226 = vld [vmem:[%s1 + $0x28] sm:$0xff]
      %v227 = vld [vmem:[%s1 + $0x30] sm:$0xff]
      %v228 = vld [vmem:[%s1 + $0x38] sm:$0xff]
      %v229 = vld [vmem:[%s1 + $0x40] sm:$0xff]
      %v230 = vld [vmem:[%s1 + $0x48] sm:$0xff]
      %v231 = vld [vmem:[%s1 + $0x50] sm:$0xff]
      %v232 = vld [vmem:[%s1 + $0x58] sm:$0xff]
      %v233 = vld [vmem:[%s1 + $0x60] sm:$0xff]
      %v234 = vld [vmem:[%s1 + $0x68] sm:$0xff]
      %v235 = vld [vmem:[%s1 + $0x70] sm:$0xff]
      %v236 = vld [vmem:[%s1 + $0x78] sm:$0xff]
      %v237 = vld [vmem:[%s2] sm:$0x1]
      %v239 = vperm.slane %v237, 0
      %241 = vmatpush.msra.mxu0 %v236
      %242 = vmatpush.msra.mxu0 %v235
      %243 = vmatpush.msra.mxu0 %v234
      %244 = vmatpush.msra.mxu0 %v233
      %245 = vmatpush.msra.mxu0 %v232
      %246 = vmatpush.msra.mxu0 %v231
      %247 = vmatpush.msra.mxu0 %v230
      %248 = vmatpush.msra.mxu0 %v229
      %249 = vmatpush.msra.mxu0 %v228
      %250 = vmatpush.msra.mxu0 %v227
      %251 = vmatpush.msra.mxu0 %v226
      %252 = vmatpush.msra.mxu0 %v225
      %253 = vmatpush.msra.mxu0 %v224
      %254 = vmatpush.msra.mxu0 %v223
      %255 = vmatpush.msra.mxu0 %v222
      %256 = vmatpush.msra.mxu0 %v221
      %257 = vmatmul.f32.gmra.mxu0 %v220
      %v258 = vpop.f32.mrf.mxu0
      %v259 = vadd.f32 %v239, %v258
      %260 = vdwg.mxu0
      %v261 = vmul.f32 %v259, 0.5
      %v262 = vmul.f32 %v259, 0.70710677
      %v263 = vmul.f32 %v262, %v262
      %v264 = vmin.f32 16.0, %v263
      %v265 = vmul.f32 %v264, 2.1237322e-06
      %v266 = vadd.f32 %v265, 0.00028619796
      %v267 = vmul.f32 %v264, %v266
      %v268 = vadd.f32 %v267, 0.0036580483
      %v269 = vmul.f32 %v264, %v268
      %v270 = vadd.f32 %v269, 0.05243302
      %v271 = vmul.f32 %v264, %v270
      %v272 = vadd.f32 %v271, 0.18741608
      %v273 = vmul.f32 %v264, %v272
      %v274 = vadd.f32 %v273, 1.1283791
      %v275 = vmul.f32 %v262, %v274
      %v276 = vmul.f32 %v264, 3.8918573e-05
      %v277 = vadd.f32 %v276, 0.001143296
      %v278 = vmul.f32 %v264, %v277
      %v279 = vadd.f32 %v278, 0.014752088
      %v280 = vmul.f32 %v264, %v279
      %v281 = vadd.f32 %v280, 0.112945676
      %v282 = vmul.f32 %v264, %v281
      %v283 = vadd.f32 %v282, 0.4994258
      %v284 = vmul.f32 %v264, %v283
      %v285 = vadd.f32 %v284, 1.0
      %v286 = vrcp.pop %v285
      %v287 = vmul.f32 %v285, %v286
      %v288 = vsub.f32 1.0, %v287
      %v289 = vmul.f32 %v286, %v288
      %v290 = vadd.f32 %v286, %v289
      %vm291 = vweird.f32 %v285
      %vm292 = vweird.f32 %v286
      %vm293 = vmor %vm291, %vm292
      %v294 = vsel %vm293, %v286, %v290
      %v295 = vand.u32 2147483647, %v285
      %vm296 = vcmp.eq.f32.partialorder %v295, 8.507059e+37
      %v297 = vand.u32 %v285, 2147483648
      %v298 = vor.u32 1.1754944e-38, %v297
      %v299 = vsel %vm296, %v298, %v294
      %v300 = vmul.f32 %v275, %v299
      %v301 = vmin.f32 %v300, 1.0
      %v302 = vmax.f32 %v301, -1.0
      %v303 = vadd.f32 %v302, 1.0
      %v304 = vmul.f32 %v261, %v303
      %v305 = vld [vmem:[%s3] sm:$0xff]
      %v306 = vld [vmem:[%s3 + $0x8] sm:$0xff]
      %v307 = vld [vmem:[%s3 + $0x10] sm:$0xff]
      %v308 = vld [vmem:[%s3 + $0x18] sm:$0xff]
      %v309 = vld [vmem:[%s3 + $0x20] sm:$0xff]
      %v310 = vld [vmem:[%s3 + $0x28] sm:$0xff]
      %v311 = vld [vmem:[%s3 + $0x30] sm:$0xff]
      %v312 = vld [vmem:[%s3 + $0x38] sm:$0xff]
      %v313 = vld [vmem:[%s3 + $0x40] sm:$0xff]
      %v314 = vld [vmem:[%s3 + $0x48] sm:$0xff]
      %v315 = vld [vmem:[%s3 + $0x50] sm:$0xff]
      %v316 = vld [vmem:[%s3 + $0x58] sm:$0xff]
      %v317 = vld [vmem:[%s3 + $0x60] sm:$0xff]
      %v318 = vld [vmem:[%s3 + $0x68] sm:$0xff]
      %v319 = vld [vmem:[%s3 + $0x70] sm:$0xff]
      %v320 = vld [vmem:[%s3 + $0x78] sm:$0xff]
      %v321 = vld [vmem:[%s4] sm:$0x1]
      %v323 = vperm.slane %v321, 0
      %325 = vmatpush.msra.mxu0 %v320
      %326 = vmatpush.msra.mxu0 %v319
      %327 = vmatpush.msra.mxu0 %v318
      %328 = vmatpush.msra.mxu0 %v317
      %329 = vmatpush.msra.mxu0 %v316
      %330 = vmatpush.msra.mxu0 %v315
      %331 = vmatpush.msra.mxu0 %v314
      %332 = vmatpush.msra.mxu0 %v313
      %333 = vmatpush.msra.mxu0 %v312
      %334 = vmatpush.msra.mxu0 %v311
      %335 = vmatpush.msra.mxu0 %v310
      %336 = vmatpush.msra.mxu0 %v309
      %337 = vmatpush.msra.mxu0 %v308
      %338 = vmatpush.msra.mxu0 %v307
      %339 = vmatpush.msra.mxu0 %v306
      %340 = vmatpush.msra.mxu0 %v305
      %341 = vmatmul.f32.gmra.mxu0 %v304
      %v342 = vpop.f32.mrf.mxu0
      %v343 = vadd.f32 %v323, %v342
      %344 = vdwg.mxu0
      %345 = vst [vmem:[%s219] sm:$0xff] %v343
      %p346 = scmp.lt.s32.totalorder %s16, 1
      %s347 = scalar_select %p346, %s16, 1
      %s348 = smul.addr %s347, 8
      %s349 = scalar_lea.vmem %s5, %s348
      // Predicated region
      $region41: #{feed_forward.1} parent=39 // pred_check
        %p350 = pneg %p144
      $region42: #{feed_forward.1} parent=39 // pred_check_branch
        %352 = sbr.rel (%p350) target = $region44
      $region43: #{feed_forward.1} parent=39 // pred_region
        _
      $region44: #{feed_forward.1} parent=39 // pred_fallthru
        _
    $region40: #{feed_forward.1} parent=5 // pred_fallthru
      _
    %p353 = scmp.le.s32.totalorder 2, %s11
    // Predicated region
    $region45: #{feed_forward.1} parent=5 // pred_check
      %p354 = pneg %p353
    $region46: #{feed_forward.1} parent=5 // pred_check_branch
      %356 = sbr.rel (%p354) target = $region48
    $region47: #{feed_forward.1} parent=5 // pred_region
      %s357 = ssub.s32 %s11, 2
      // Predicated region
      $region49: #{feed_forward.1} parent=47 // pred_check
        %p358 = pneg %p150
      $region50: #{feed_forward.1} parent=47 // pred_check_branch
        %360 = sbr.rel (%p358) target = $region52
      $region51: #{feed_forward.1} parent=47 // pred_region
        %p361 = scmp.lt.s32.totalorder %s17, 1
        %s362 = scalar_select %p361, %s17, 1
        %s363 = smul.addr %s362, 8
        %s364 = scalar_lea.vmem %s5, %s363
      $region52: #{feed_forward.1} parent=47 // pred_fallthru
        _
    $region48: #{feed_forward.1} parent=5 // pred_fallthru
      _
  $region6: #{feed_forward.1} parent=0 // loop_footer
    %s15 = sadd.s32 1, %s11
  $region7: #{feed_forward.1} parent=0 // loop_footer_branch
    %10 = sbr.rel target = $region3
  $region8: #{feed_forward.1} parent=0 // loop_exit
    _

</llo_original>
